<compile_context>
chip_gen: v5e
topology: v5e:2x2
jax: 0.10.0
libtpu: 0.0.40
codegen_flags: <defaults>
</compile_context>

<pallas_src>
import functools

import jax
import jax.numpy as jnp
from jax.experimental import pallas as pl
from jax.experimental.pallas import tpu as pltpu


def _classifier_kernel(x_ref, w1_ref, b1_ref, w2_ref, b2_ref,
                       h1_ref, h2_ref):
    x = x_ref[...]                                        # (tb, D_in) f32
    # bottleneck Linear (MXU, f32 accumulation) + bias.
    h1 = jnp.dot(x, w1_ref[...],
                 preferred_element_type=jnp.float32) + b1_ref[...]
    h1_ref[...] = h1.astype(h1_ref.dtype)
    # LeakyReLU(0.2): maximum(h1, 0.2*h1) is identical for slope in (0,1).
    a = jnp.maximum(h1, 0.2 * h1)
    # fc Linear into the unpadded (tb, D_out) output block.
    h2 = jnp.dot(a, w2_ref[...],
                 preferred_element_type=jnp.float32) + b2_ref[...]
    h2_ref[...] = h2.astype(h2_ref.dtype)


def _pick_batch_tile(B, block_b, D_in, H, D_out):
    """Batch-tile rows per grid step."""
    if B <= 8:
        return B                              # single tiny block (== full dim)
    # >= 2 grid steps so v7x's two TensorCores both get work under "parallel".
    tb = min(block_b, pl.cdiv(B, 2))
    tb = ((tb + 7) // 8) * 8                  # sublane-align partial tiles
    # Cap so double-buffered f32 activation tiles stay well under the v7x
    # 32 MiB scoped-VMEM default (weights are tiny and resident).
    bytes_per_row = 4 * (D_in + H + D_out) * 2
    max_rows = max(8, ((24 << 20) // bytes_per_row) // 8 * 8)
    return min(tb, max_rows, ((B + 7) // 8) * 8)


@functools.partial(jax.jit, static_argnames=("block_b",))
def classifier_forward(x, w1_t, b1, w2_t, b2, *, block_b=2048):
    """Returns [x, h1, h2] matching the PyTorch module's output list.

    x:    (B, D_in)  f32
    w1_t: (D_in, H)  f32  (bottleneck weight, pre-transposed)
    b1:   (H,)       f32
    w2_t: (H, D_out) f32  (fc weight, pre-transposed)
    b2:   (D_out,)   f32
    """
    B, D_in = x.shape
    H = w1_t.shape[1]
    D_out = w2_t.shape[1]

    b1_2d = b1.reshape(1, H)
    b2_2d = b2.reshape(1, D_out)

    tb = _pick_batch_tile(B, block_b, D_in, H, D_out)
    grid = (pl.cdiv(B, tb),)

    in_specs = [
        pl.BlockSpec((tb, D_in), lambda i: (i, 0)),      # x tile (pipelined)
        pl.BlockSpec((D_in, H), lambda i: (0, 0)),       # W1 (VMEM-resident)
        pl.BlockSpec((1, H), lambda i: (0, 0)),          # b1 (resident)
        pl.BlockSpec((H, D_out), lambda i: (0, 0)),      # W2 (resident)
        pl.BlockSpec((1, D_out), lambda i: (0, 0)),      # b2 (resident)
    ]
    out_specs = (
        pl.BlockSpec((tb, H), lambda i: (i, 0)),         # h1 tile
        pl.BlockSpec((tb, D_out), lambda i: (i, 0)),     # h2 tile (unpadded)
    )

    flops = 2 * B * (D_in * H + H * D_out)
    bytes_accessed = (
        B * D_in * 4                                     # x read
        + D_in * H * 4 + H * 4                           # W1, b1
        + H * D_out * 4 + D_out * 4                      # W2, b2
        + B * H * 4 + B * D_out * 4                      # h1, h2 writeback
    )

    h1, h2 = pl.pallas_call(
        _classifier_kernel,
        out_shape=(
            jax.ShapeDtypeStruct((B, H), jnp.float32),
            jax.ShapeDtypeStruct((B, D_out), jnp.float32),
        ),
        grid=grid,
        in_specs=in_specs,
        out_specs=out_specs,
        compiler_params=pltpu.CompilerParams(
            dimension_semantics=("parallel",),
            vmem_limit_bytes=64 << 20),
        cost_estimate=pl.CostEstimate(
            flops=flops, transcendentals=0, bytes_accessed=bytes_accessed),
    )(x, w1_t, b1_2d, w2_t, b2_2d)

    return [x, h1, h2]


def _init_linear(key, in_f, out_f):
    """PyTorch nn.Linear default init: U(-1/sqrt(in_f), 1/sqrt(in_f))."""
    kw, kb = jax.random.split(key)
    bound = 1.0 / jnp.sqrt(jnp.float32(in_f))
    w = jax.random.uniform(kw, (out_f, in_f), jnp.float32, -bound, bound)
    b = jax.random.uniform(kb, (out_f,), jnp.float32, -bound, bound)
    return w, b


def _reference(x, w1, b1, w2, b2):
    h1 = x @ w1.T + b1
    a = jnp.where(h1 > 0, h1, 0.2 * h1)
    h2 = a @ w2.T + b2
    return [x, h1, h2]


if __name__ == "__main__":
    key = jax.random.PRNGKey(0)
    k_x, k_l1, k_l2 = jax.random.split(key, 3)

    # Small but grid-exercising shapes (>= 2 batch tiles).
    batch, input_dim, hidden_dim, output_dim = 256, 32, 256, 16

    x = jax.random.normal(k_x, (batch, input_dim), jnp.float32)
    w1, b1 = _init_linear(k_l1, input_dim, hidden_dim)    # bottleneck
    w2, b2 = _init_linear(k_l2, hidden_dim, output_dim)   # fc

    # Pre-transpose weights to (in, out) for the kernel matmuls.
    out = classifier_forward(x, w1.T, b1, w2.T, b2)
    out = jax.block_until_ready(out)

    ref = _reference(x, w1, b1, w2, b2)
    for o, r in zip(out, ref):
        assert o.shape == r.shape and o.dtype == r.dtype
        # f32 operands with f32 accumulation; tolerance covers MXU rounding.
        assert jnp.allclose(o, r, atol=1e-2, rtol=1e-2)

    print("KERNEL_OK")
</pallas_src>

<mosaic_0001>
module attributes {stable_mosaic.version = 11 : i64} {
  func.func @_classifier_kernel(%arg0: i32, %arg1: memref<128x32xf32, #tpu.memory_space<vmem>>, %arg2: memref<32x256xf32, #tpu.memory_space<vmem>>, %arg3: memref<1x256xf32, #tpu.memory_space<vmem>>, %arg4: memref<256x16xf32, #tpu.memory_space<vmem>>, %arg5: memref<1x16xf32, #tpu.memory_space<vmem>>, %arg6: memref<128x256xf32, #tpu.memory_space<vmem>>, %arg7: memref<128x16xf32, #tpu.memory_space<vmem>>) attributes {dimension_semantics = [#tpu.dimension_semantics<parallel>], iteration_bounds = array<i64: 2>, scalar_prefetch = 0 : i64, scratch_operands = 0 : i64, tpu.core_type = #tpu.core_type<tc>, window_params = [{transform_indices = @transform_0, window_bounds = array<i64: 128, 32>}, {pipeline_mode = #tpu.pipeline_mode<synchronous>, transform_indices = @transform_1, window_bounds = array<i64: 32, 256>}, {pipeline_mode = #tpu.pipeline_mode<synchronous>, transform_indices = @transform_2, window_bounds = array<i64: 1, 256>}, {pipeline_mode = #tpu.pipeline_mode<synchronous>, transform_indices = @transform_3, window_bounds = array<i64: 256, 16>}, {pipeline_mode = #tpu.pipeline_mode<synchronous>, transform_indices = @transform_4, window_bounds = array<i64: 1, 16>}, {transform_indices = @transform_5, window_bounds = array<i64: 128, 256>}, {transform_indices = @transform_6, window_bounds = array<i64: 128, 16>}]} {
    %c0 = arith.constant 0 : index
    %c0_0 = arith.constant 0 : index
    %0 = vector.load %arg1[%c0, %c0_0] : memref<128x32xf32, #tpu.memory_space<vmem>>, vector<128x32xf32>
    %c0_1 = arith.constant 0 : index
    %c0_2 = arith.constant 0 : index
    %1 = vector.load %arg2[%c0_1, %c0_2] : memref<32x256xf32, #tpu.memory_space<vmem>>, vector<32x256xf32>
    %cst = arith.constant dense<0.000000e+00> : vector<128x256xf32>
    %2 = tpu.matmul %0, %1, %cst {dimension_numbers = #tpu.dot_dimension_numbers<[1], [0], [0], [1], [0, 0, 1, 1], [], []>} : vector<128x32xf32>, vector<32x256xf32>, vector<128x256xf32> -> vector<128x256xf32>
    %c0_3 = arith.constant 0 : index
    %c0_4 = arith.constant 0 : index
    %3 = vector.load %arg3[%c0_3, %c0_4] : memref<1x256xf32, #tpu.memory_space<vmem>>, vector<1x256xf32>
    %4 = vector.broadcast %3 : vector<1x256xf32> to vector<128x256xf32>
    %5 = arith.addf %2, %4 : vector<128x256xf32>
    %c0_5 = arith.constant 0 : index
    %c0_6 = arith.constant 0 : index
    %6 = vector.load %arg6[%c0_5, %c0_6] : memref<128x256xf32, #tpu.memory_space<vmem>>, vector<128x256xf32>
    tpu.vector_store %arg6[%c0_5, %c0_6], %5 {strides = array<i32>} : memref<128x256xf32, #tpu.memory_space<vmem>>, vector<128x256xf32>,
    %cst_7 = arith.constant 2.000000e-01 : f32
    %7 = vector.broadcast %cst_7 : f32 to vector<128x256xf32>
    %8 = arith.mulf %7, %5 : vector<128x256xf32>
    %9 = arith.maximumf %5, %8 : vector<128x256xf32>
    %c0_8 = arith.constant 0 : index
    %c0_9 = arith.constant 0 : index
    %10 = vector.load %arg4[%c0_8, %c0_9] : memref<256x16xf32, #tpu.memory_space<vmem>>, vector<256x16xf32>
    %cst_10 = arith.constant dense<0.000000e+00> : vector<128x16xf32>
    %11 = tpu.matmul %9, %10, %cst_10 {dimension_numbers = #tpu.dot_dimension_numbers<[1], [0], [0], [1], [0, 0, 1, 1], [], []>} : vector<128x256xf32>, vector<256x16xf32>, vector<128x16xf32> -> vector<128x16xf32>
    %c0_11 = arith.constant 0 : index
    %c0_12 = arith.constant 0 : index
    %12 = vector.load %arg5[%c0_11, %c0_12] : memref<1x16xf32, #tpu.memory_space<vmem>>, vector<1x16xf32>
    %13 = vector.broadcast %12 : vector<1x16xf32> to vector<128x16xf32>
    %14 = arith.addf %11, %13 : vector<128x16xf32>
    %c0_13 = arith.constant 0 : index
    %c0_14 = arith.constant 0 : index
    %15 = vector.load %arg7[%c0_13, %c0_14] : memref<128x16xf32, #tpu.memory_space<vmem>>, vector<128x16xf32>
    tpu.vector_store %arg7[%c0_13, %c0_14], %14 {strides = array<i32>} : memref<128x16xf32, #tpu.memory_space<vmem>>, vector<128x16xf32>,
    return
  }
  func.func @transform_0(%arg0: i32) -> (i32, i32) {
    %c0_i32 = arith.constant 0 : i32
    %c0_i32_0 = arith.constant 0 : i32
    return %arg0, %c0_i32 : i32, i32
  }
  func.func @transform_1(%arg0: i32) -> (i32, i32) {
    %c0_i32 = arith.constant 0 : i32
    %c0_i32_0 = arith.constant 0 : i32
    %c0_i32_1 = arith.constant 0 : i32
    return %c0_i32, %c0_i32_0 : i32, i32
  }
  func.func @transform_2(%arg0: i32) -> (i32, i32) {
    %c0_i32 = arith.constant 0 : i32
    %c0_i32_0 = arith.constant 0 : i32
    %c0_i32_1 = arith.constant 0 : i32
    return %c0_i32, %c0_i32_0 : i32, i32
  }
  func.func @transform_3(%arg0: i32) -> (i32, i32) {
    %c0_i32 = arith.constant 0 : i32
    %c0_i32_0 = arith.constant 0 : i32
    %c0_i32_1 = arith.constant 0 : i32
    return %c0_i32, %c0_i32_0 : i32, i32
  }
  func.func @transform_4(%arg0: i32) -> (i32, i32) {
    %c0_i32 = arith.constant 0 : i32
    %c0_i32_0 = arith.constant 0 : i32
    %c0_i32_1 = arith.constant 0 : i32
    return %c0_i32, %c0_i32_0 : i32, i32
  }
  func.func @transform_5(%arg0: i32) -> (i32, i32) {
    %c0_i32 = arith.constant 0 : i32
    %c0_i32_0 = arith.constant 0 : i32
    return %arg0, %c0_i32 : i32, i32
  }
  func.func @transform_6(%arg0: i32) -> (i32, i32) {
    %c0_i32 = arith.constant 0 : i32
    %c0_i32_0 = arith.constant 0 : i32
    return %arg0, %c0_i32 : i32, i32
  }
}

</mosaic_0001>

<llo_original>
// kernel: classifier_forward.1
$region0: #{classifier_forward.1}
  #allocation0 [shape = 'u32[]', space=smem, size = 0x4, offset = 0x4, fixed_abs, tag = 'smem constant byte address 0x4 - core index']
  #allocation1 [shape = 'u32[72,128]{1,0:T(1,128)}', space=vmem, size = 0x9000, scoped, tag = 'internal scratch']
  %s0 = inlined_call_operand.vmem [shape: f32[256,32], index: 0, kind: input, shape index: {}]
  %s1 = inlined_call_operand.vmem [shape: f32[32,256], index: 1, kind: input, shape index: {}]
  %s2 = inlined_call_operand.vmem [shape: f32[1,256], index: 2, kind: input, shape index: {}]
  %s3 = inlined_call_operand.vmem [shape: f32[256,16], index: 3, kind: input, shape index: {}]
  %s4 = inlined_call_operand.vmem [shape: f32[1,16], index: 4, kind: input, shape index: {}]
  %s5 = inlined_call_operand.hbm [shape: f32[256,256], index: 5, kind: output, shape index: {0}]
  %s6 = inlined_call_operand.vmem [shape: f32[256,16], index: 6, kind: output, shape index: {1}]
  %7 = xla_tuple %s5, %s6
  %s8 = sld [smem:[#allocation0]]
  $region61: #{classifier_forward.1} parent=0
    _
  %s10 = ssub.s32 1, %s8
  %s11 = scalar_select 0, %s10, %s8
  $region1: #{classifier_forward.1} parent=0
    #allocation2 [shape = 'u8[262144]{0}', space=vmem, size = 0x40000, scoped, tag = 'output window, operand 0']
    #allocation3 [shape = 's32[2]{0}', space=sflag, size = 0x8, scoped, tag = 'scoped memory for classifier_forward.1']
    %12 = vsyncpa [#allocation3], 0
    %s13 = scalar_lea.sflag [#allocation3], 1
    %14 = vsyncpa %s13, 0
    loop: start=0, step=1, limit=4
    $region2: #{classifier_forward.1} parent=1 // loop_pre_header
      _
    $region3: #{classifier_forward.1} parent=1 // loop_header
      %s16 = sphi 0, %s20
      %p17 = scmp.ge.s32.totalorder %s16, 4
      %s26 = sphi 0, %s28
      %s29 = sphi 0, %s26
      %s30 = sphi 0, %s29
      %s46 = sphi 0, %s30
      %s50 = sphi 0, %s50
      %s52 = sphi 0, %s50
      %s53 = sphi 0, %s52
      %s67 = sphi 0, %s53
      %s71 = sphi 0, %s71
      %s73 = sphi 0, %s71
      %s74 = sphi 0, %s73
      %s88 = sphi 0, %s74
      %s92 = sphi 0, %s92
      %s94 = sphi 0, %s92
      %s95 = sphi 0, %s94
      %s109 = sphi 0, %s95
      %s113 = sphi 0, %s113
      %s115 = sphi 0, %s113
      %s116 = sphi 0, %s115
      %s130 = sphi 0, %s116
      %s136 = sphi 0, %s138
      %s139 = sphi 0, %s136
      %s140 = sphi 0, %s139
      %s156 = sphi 0, %s140
      %s162 = sphi 0, %s164
      %s165 = sphi 0, %s162
      %s166 = sphi 0, %s165
      %s182 = sphi 0, %s166
    $region4: #{classifier_forward.1} parent=1 // loop_header_branch
      %19 = sbr.rel (%p17) target = $region8
    $region5: #{classifier_forward.1} parent=1 // loop_body
      %s21 = ssub.s32 %s16, 1
      %s22 = ssub.s32 %s16, 2
      %s23 = sadd.s32 %s16, 1
      %s24 = ssub.s32 %s16, %s23
      %p25 = scmp.eq.s32.totalorder %s24, 0
      %s27 = sadd.s32 %s26, 1
      %s28 = scalar_select %p25, %s26, %s27
      %p31 = pneg %p25
      %p32 = scmp.eq.s32.totalorder %s16, 1
      %p33 = por %p31, %p32
      %p34 = scmp.ne.s32.totalorder %s26, %s29
      %p35 = scmp.eq.s32.totalorder %s16, 0
      %p36 = por %p34, %p35
      %p37 = scmp.ne.s32.totalorder %s26, %s29
      %p38 = scmp.eq.s32.totalorder %s21, 1
      %p39 = por %p37, %p38
      %p40 = scmp.ne.s32.totalorder %s29, %s30
      %p41 = scmp.eq.s32.totalorder %s21, 0
      %p42 = por %p40, %p41
      %p43 = scmp.ne.s32.totalorder %s29, %s30
      %p44 = scmp.eq.s32.totalorder %s22, 1
      %p45 = por %p43, %p44
      %p47 = scmp.ne.s32.totalorder %s30, %s46
      %p48 = scmp.eq.s32.totalorder %s22, 0
      %p49 = por %p47, %p48
      %s51 = sadd.s32 %s50, 1
      %p54 = scmp.eq.s32.totalorder %s16, 1
      %p55 = scmp.ne.s32.totalorder %s50, %s52
      %p56 = scmp.eq.s32.totalorder %s16, 0
      %p57 = por %p55, %p56
      %p58 = scmp.ne.s32.totalorder %s50, %s52
      %p59 = scmp.eq.s32.totalorder %s21, 1
      %p60 = por %p58, %p59
      %p61 = scmp.ne.s32.totalorder %s52, %s53
      %p62 = scmp.eq.s32.totalorder %s21, 0
      %p63 = por %p61, %p62
      %p64 = scmp.ne.s32.totalorder %s52, %s53
      %p65 = scmp.eq.s32.totalorder %s22, 1
      %p66 = por %p64, %p65
      %p68 = scmp.ne.s32.totalorder %s53, %s67
      %p69 = scmp.eq.s32.totalorder %s22, 0
      %p70 = por %p68, %p69
      %s72 = sadd.s32 %s71, 1
      %p75 = scmp.eq.s32.totalorder %s16, 1
      %p76 = scmp.ne.s32.totalorder %s71, %s73
      %p77 = scmp.eq.s32.totalorder %s16, 0
      %p78 = por %p76, %p77
      %p79 = scmp.ne.s32.totalorder %s71, %s73
      %p80 = scmp.eq.s32.totalorder %s21, 1
      %p81 = por %p79, %p80
      %p82 = scmp.ne.s32.totalorder %s73, %s74
      %p83 = scmp.eq.s32.totalorder %s21, 0
      %p84 = por %p82, %p83
      %p85 = scmp.ne.s32.totalorder %s73, %s74
      %p86 = scmp.eq.s32.totalorder %s22, 1
      %p87 = por %p85, %p86
      %p89 = scmp.ne.s32.totalorder %s74, %s88
      %p90 = scmp.eq.s32.totalorder %s22, 0
      %p91 = por %p89, %p90
      %s93 = sadd.s32 %s92, 1
      %p96 = scmp.eq.s32.totalorder %s16, 1
      %p97 = scmp.ne.s32.totalorder %s92, %s94
      %p98 = scmp.eq.s32.totalorder %s16, 0
      %p99 = por %p97, %p98
      %p100 = scmp.ne.s32.totalorder %s92, %s94
      %p101 = scmp.eq.s32.totalorder %s21, 1
      %p102 = por %p100, %p101
      %p103 = scmp.ne.s32.totalorder %s94, %s95
      %p104 = scmp.eq.s32.totalorder %s21, 0
      %p105 = por %p103, %p104
      %p106 = scmp.ne.s32.totalorder %s94, %s95
      %p107 = scmp.eq.s32.totalorder %s22, 1
      %p108 = por %p106, %p107
      %p110 = scmp.ne.s32.totalorder %s95, %s109
      %p111 = scmp.eq.s32.totalorder %s22, 0
      %p112 = por %p110, %p111
      %s114 = sadd.s32 %s113, 1
      %p117 = scmp.eq.s32.totalorder %s16, 1
      %p118 = scmp.ne.s32.totalorder %s113, %s115
      %p119 = scmp.eq.s32.totalorder %s16, 0
      %p120 = por %p118, %p119
      %p121 = scmp.ne.s32.totalorder %s113, %s115
      %p122 = scmp.eq.s32.totalorder %s21, 1
      %p123 = por %p121, %p122
      %p124 = scmp.ne.s32.totalorder %s115, %s116
      %p125 = scmp.eq.s32.totalorder %s21, 0
      %p126 = por %p124, %p125
      %p127 = scmp.ne.s32.totalorder %s115, %s116
      %p128 = scmp.eq.s32.totalorder %s22, 1
      %p129 = por %p127, %p128
      %p131 = scmp.ne.s32.totalorder %s116, %s130
      %p132 = scmp.eq.s32.totalorder %s22, 0
      %p133 = por %p131, %p132
      %s134 = ssub.s32 %s16, %s23
      %p135 = scmp.eq.s32.totalorder %s134, 0
      %s137 = sadd.s32 %s136, 1
      %s138 = scalar_select %p135, %s136, %s137
      %p141 = pneg %p135
      %p142 = scmp.eq.s32.totalorder %s16, 1
      %p143 = por %p141, %p142
      %p144 = scmp.ne.s32.totalorder %s136, %s139
      %p145 = scmp.eq.s32.totalorder %s16, 0
      %p146 = por %p144, %p145
      %p147 = scmp.ne.s32.totalorder %s136, %s139
      %p148 = scmp.eq.s32.totalorder %s21, 1
      %p149 = por %p147, %p148
      %p150 = scmp.ne.s32.totalorder %s139, %s140
      %p151 = scmp.eq.s32.totalorder %s21, 0
      %p152 = por %p150, %p151
      %p153 = scmp.ne.s32.totalorder %s139, %s140
      %p154 = scmp.eq.s32.totalorder %s22, 1
      %p155 = por %p153, %p154
      %p157 = scmp.ne.s32.totalorder %s140, %s156
      %p158 = scmp.eq.s32.totalorder %s22, 0
      %p159 = por %p157, %p158
      %s160 = ssub.s32 %s16, %s23
      %p161 = scmp.eq.s32.totalorder %s160, 0
      %s163 = sadd.s32 %s162, 1
      %s164 = scalar_select %p161, %s162, %s163
      %p167 = pneg %p161
      %p168 = scmp.eq.s32.totalorder %s16, 1
      %p169 = por %p167, %p168
      %p170 = scmp.ne.s32.totalorder %s162, %s165
      %p171 = scmp.eq.s32.totalorder %s16, 0
      %p172 = por %p170, %p171
      %p173 = scmp.ne.s32.totalorder %s162, %s165
      %p174 = scmp.eq.s32.totalorder %s21, 1
      %p175 = por %p173, %p174
      %p176 = scmp.ne.s32.totalorder %s165, %s166
      %p177 = scmp.eq.s32.totalorder %s21, 0
      %p178 = por %p176, %p177
      %p179 = scmp.ne.s32.totalorder %s165, %s166
      %p180 = scmp.eq.s32.totalorder %s22, 1
      %p181 = por %p179, %p180
      %p183 = scmp.ne.s32.totalorder %s166, %s182
      %p184 = scmp.eq.s32.totalorder %s22, 0
      %p185 = por %p183, %p184
      %p186 = scmp.le.s32.totalorder 1, %s16
      %p187 = scmp.lt.s32.totalorder %s16, 3
      %p188 = pnand %p186, %p187
      %p189 = pneg %p188
      // Predicated region
      $region9: #{classifier_forward.1} parent=5 // pred_check
        _
      $region10: #{classifier_forward.1} parent=5 // pred_check_branch
        %191 = sbr.rel (%p188) target = $region12
      $region11: #{classifier_forward.1} parent=5 // pred_region
        %s192 = ssub.s32 %s16, 1
        // Predicated region
        $region13: #{classifier_forward.1} parent=11 // pred_check
          %p193 = pneg %p63
        $region14: #{classifier_forward.1} parent=11 // pred_check_branch
          %195 = sbr.rel (%p193) target = $region16
        $region15: #{classifier_forward.1} parent=11 // pred_region
          _
        $region16: #{classifier_forward.1} parent=11 // pred_fallthru
          _
        // Predicated region
        $region17: #{classifier_forward.1} parent=11 // pred_check
          %p196 = pneg %p84
        $region18: #{classifier_forward.1} parent=11 // pred_check_branch
          %198 = sbr.rel (%p196) target = $region20
        $region19: #{classifier_forward.1} parent=11 // pred_region
          _
        $region20: #{classifier_forward.1} parent=11 // pred_fallthru
          _
        // Predicated region
        $region21: #{classifier_forward.1} parent=11 // pred_check
          %p199 = pneg %p105
        $region22: #{classifier_forward.1} parent=11 // pred_check_branch
          %201 = sbr.rel (%p199) target = $region24
        $region23: #{classifier_forward.1} parent=11 // pred_region
          _
        $region24: #{classifier_forward.1} parent=11 // pred_fallthru
          _
        // Predicated region
        $region25: #{classifier_forward.1} parent=11 // pred_check
          %p202 = pneg %p126
        $region26: #{classifier_forward.1} parent=11 // pred_check_branch
          %204 = sbr.rel (%p202) target = $region28
        $region27: #{classifier_forward.1} parent=11 // pred_region
          _
        $region28: #{classifier_forward.1} parent=11 // pred_fallthru
          _
      $region12: #{classifier_forward.1} parent=5 // pred_fallthru
        _
      %p205 = scmp.lt.s32.totalorder %s16, 2
      // Predicated region
      $region29: #{classifier_forward.1} parent=5 // pred_check
        %p206 = pneg %p205
      $region30: #{classifier_forward.1} parent=5 // pred_check_branch
        %208 = sbr.rel (%p206) target = $region32
      $region31: #{classifier_forward.1} parent=5 // pred_region
        // Predicated region
        $region33: #{classifier_forward.1} parent=31 // pred_check
          %p209 = pneg %p36
        $region34: #{classifier_forward.1} parent=31 // pred_check_branch
          %211 = sbr.rel (%p209) target = $region36
        $region35: #{classifier_forward.1} parent=31 // pred_region
          %s212 = smul.u32 16, %s16
          %p213 = scmp.lt.s32.totalorder %s212, 31
          %s214 = scalar_select %p213, %s212, 31
          %s215 = smul.addr %s214, 8
          %s216 = scalar_lea.vmem %s0, %s215
          %s217 = smul.u32 16, %s16
        $region36: #{classifier_forward.1} parent=31 // pred_fallthru
          _
      $region32: #{classifier_forward.1} parent=5 // pred_fallthru
        _
      %p218 = scmp.le.s32.totalorder 1, %s16
      %p219 = scmp.lt.s32.totalorder %s16, 3
      %p220 = pnand %p218, %p219
      %p221 = pneg %p220
      // Predicated region
      $region37: #{classifier_forward.1} parent=5 // pred_check
        _
      $region38: #{classifier_forward.1} parent=5 // pred_check_branch
        %223 = sbr.rel (%p220) target = $region40
      $region39: #{classifier_forward.1} parent=5 // pred_region
        %s224 = ssub.s32 %s16, 1
        %s225 = smul.u32 16, %s21
        %p226 = scmp.lt.s32.totalorder %s225, 31
        %s227 = scalar_select %p226, %s225, 31
        %s228 = smul.addr %s227, 8
        %s229 = scalar_lea.vmem %s0, %s228
        %p230 = pneg %p42
        %p231 = pneg %p39
        %p232 = pneg %p63
        %p233 = pneg %p60
        %p234 = pneg %p84
        %p235 = pneg %p81
        %p236 = pneg %p105
        %p237 = pneg %p102
        %p238 = pneg %p126
        %p239 = pneg %p123
        %p240 = pneg %p152
        %p241 = pneg %p149
        %s242 = sand.u32 %s139, 1
        %s243 = scalar_lea.sflag [#allocation3], %s242
        %s244 = sand.u32 %s139, 1
        %s245 = smul.addr %s244, 256
        %s246 = scalar_lea.vmem [#allocation2], %s245
        %p247 = pneg %p178
        %p248 = pneg %p175
        %s249 = smul.u32 16, %s21
        %p250 = scmp.lt.s32.totalorder %s249, 31
        %s251 = scalar_select %p250, %s249, 31
        %s252 = smul.addr %s251, 8
        %s253 = scalar_lea.vmem %s6, %s252
        %s254 = smul.u32 16, %s21
        %p255 = scmp.lt.s32.totalorder %s254, 31
        %s256 = scalar_select %p255, %s254, 31
        %s257 = smul.addr %s256, 8
        %s258 = scalar_lea.vmem %s0, %s257
        %s259 = smul.u32 16, %s21
        %s260 = smul.u32 16, %s21
        %s261 = smul.u32 16, %s21
        %p262 = scmp.lt.s32.totalorder %s261, 31
        %s263 = scalar_select %p262, %s261, 31
        %s264 = smul.addr %s263, 8
        %s265 = scalar_lea.vmem %s6, %s264
        %s266 = smul.u32 16, %s21
        %v267 = vld [vmem:[%s258] sm:$0xff]
        %v268 = vld [vmem:[%s258 + $0x8] sm:$0xff]
        %v269 = vld [vmem:[%s258 + $0x10] sm:$0xff]
        %v270 = vld [vmem:[%s258 + $0x18] sm:$0xff]
        %v271 = vld [vmem:[%s258 + $0x20] sm:$0xff]
        %v272 = vld [vmem:[%s258 + $0x28] sm:$0xff]
        %v273 = vld [vmem:[%s258 + $0x30] sm:$0xff]
        %v274 = vld [vmem:[%s258 + $0x38] sm:$0xff]
        %v275 = vld [vmem:[%s258 + $0x40] sm:$0xff]
        %v276 = vld [vmem:[%s258 + $0x48] sm:$0xff]
        %v277 = vld [vmem:[%s258 + $0x50] sm:$0xff]
        %v278 = vld [vmem:[%s258 + $0x58] sm:$0xff]
        %v279 = vld [vmem:[%s258 + $0x60] sm:$0xff]
        %v280 = vld [vmem:[%s258 + $0x68] sm:$0xff]
        %v281 = vld [vmem:[%s258 + $0x70] sm:$0xff]
        %v282 = vld [vmem:[%s258 + $0x78] sm:$0xff]
        %v283 = vld [vmem:[%s1] sm:$0xff]
        %v284 = vld [vmem:[%s1 + $0x8] sm:$0xff]
        %v285 = vld [vmem:[%s1 + $0x10] sm:$0xff]
        %v286 = vld [vmem:[%s1 + $0x18] sm:$0xff]
        %v287 = vld [vmem:[%s1 + $0x20] sm:$0xff]
        %v288 = vld [vmem:[%s1 + $0x28] sm:$0xff]
        %v289 = vld [vmem:[%s1 + $0x30] sm:$0xff]
        %v290 = vld [vmem:[%s1 + $0x38] sm:$0xff]
        %v291 = vld [vmem:[%s2] sm:$0x3]
        %v293 = vperm.slane %v291, 0
        %v294 = vperm.slane %v291, 1
        %vm297 = vcmask 261120
        %v299 = vsel %vm297, %v267, 0
        %v302 = vsel %vm297, %v268, 0
        %v305 = vsel %vm297, %v269, 0
        %v308 = vsel %vm297, %v270, 0
        %v311 = vsel %vm297, %v271, 0
        %v314 = vsel %vm297, %v272, 0
        %v317 = vsel %vm297, %v273, 0
        %v320 = vsel %vm297, %v274, 0
        %v323 = vsel %vm297, %v275, 0
        %v326 = vsel %vm297, %v276, 0
        %v329 = vsel %vm297, %v277, 0
        %v332 = vsel %vm297, %v278, 0
        %v335 = vsel %vm297, %v279, 0
        %v338 = vsel %vm297, %v280, 0
        %v341 = vsel %vm297, %v281, 0
        %v344 = vsel %vm297, %v282, 0
        %346 = vmatpush.msra.mxu0 0.0
        %347 = vmatpush.msra.mxu0 0.0
        %348 = vmatpush.msra.mxu0 0.0
        %349 = vmatpush.msra.mxu0 0.0
        %350 = vmatpush.msra.mxu0 0.0
        %351 = vmatpush.msra.mxu0 0.0
        %352 = vmatpush.msra.mxu0 0.0
        %353 = vmatpush.msra.mxu0 0.0
        %354 = vmatpush.msra.mxu0 0.0
        %355 = vmatpush.msra.mxu0 0.0
        %356 = vmatpush.msra.mxu0 0.0
        %357 = vmatpush.msra.mxu0 0.0
        %358 = vmatpush.msra.mxu0 %v289
        %359 = vmatpush.msra.mxu0 %v287
        %360 = vmatpush.msra.mxu0 %v285
        %361 = vmatpush.msra.mxu0 %v283
        %362 = vmatmul.f32.gmra.mxu0 %v299
        %v363 = vpop.f32.mrf.mxu0
        %v364 = vadd.f32 %v293, %v363
        %365 = vmatmul.f32.gmra.mxu0 %v302
        %v366 = vpop.f32.mrf.mxu0
        %v367 = vadd.f32 %v293, %v366
        %368 = vmatmul.f32.gmra.mxu0 %v305
        %v369 = vpop.f32.mrf.mxu0
        %v370 = vadd.f32 %v293, %v369
        %371 = vmatmul.f32.gmra.mxu0 %v308
        %v372 = vpop.f32.mrf.mxu0
        %v373 = vadd.f32 %v293, %v372
        %374 = vmatmul.f32.gmra.mxu0 %v311
        %v375 = vpop.f32.mrf.mxu0
        %v376 = vadd.f32 %v293, %v375
        %377 = vmatmul.f32.gmra.mxu0 %v314
        %v378 = vpop.f32.mrf.mxu0
        %v379 = vadd.f32 %v293, %v378
        %380 = vmatmul.f32.gmra.mxu0 %v317
        %v381 = vpop.f32.mrf.mxu0
        %v382 = vadd.f32 %v293, %v381
        %383 = vmatmul.f32.gmra.mxu0 %v320
        %v384 = vpop.f32.mrf.mxu0
        %v385 = vadd.f32 %v293, %v384
        %386 = vmatmul.f32.gmra.mxu0 %v323
        %v387 = vpop.f32.mrf.mxu0
        %v388 = vadd.f32 %v293, %v387
        %389 = vmatmul.f32.gmra.mxu0 %v326
        %v390 = vpop.f32.mrf.mxu0
        %v391 = vadd.f32 %v293, %v390
        %392 = vmatmul.f32.gmra.mxu0 %v329
        %v393 = vpop.f32.mrf.mxu0
        %v394 = vadd.f32 %v293, %v393
        %395 = vmatmul.f32.gmra.mxu0 %v332
        %v396 = vpop.f32.mrf.mxu0
        %v397 = vadd.f32 %v293, %v396
        %398 = vmatmul.f32.gmra.mxu0 %v335
        %v399 = vpop.f32.mrf.mxu0
        %v400 = vadd.f32 %v293, %v399
        %401 = vmatmul.f32.gmra.mxu0 %v338
        %v402 = vpop.f32.mrf.mxu0
        %v403 = vadd.f32 %v293, %v402
        %404 = vmatmul.f32.gmra.mxu0 %v341
        %v405 = vpop.f32.mrf.mxu0
        %v406 = vadd.f32 %v293, %v405
        %407 = vmatmul.f32.gmra.mxu0 %v344
        %v408 = vpop.f32.mrf.mxu0
        %v409 = vadd.f32 %v293, %v408
        %410 = vdwg.mxu0
        %411 = vmatpush.msra.mxu0 0.0
        %412 = vmatpush.msra.mxu0 0.0
        %413 = vmatpush.msra.mxu0 0.0
        %414 = vmatpush.msra.mxu0 0.0
        %415 = vmatpush.msra.mxu0 0.0
        %416 = vmatpush.msra.mxu0 0.0
        %417 = vmatpush.msra.mxu0 0.0
        %418 = vmatpush.msra.mxu0 0.0
        %419 = vmatpush.msra.mxu0 0.0
        %420 = vmatpush.msra.mxu0 0.0
        %421 = vmatpush.msra.mxu0 0.0
        %422 = vmatpush.msra.mxu0 0.0
        %423 = vmatpush.msra.mxu0 %v290
        %424 = vmatpush.msra.mxu0 %v288
        %425 = vmatpush.msra.mxu0 %v286
        %426 = vmatpush.msra.mxu0 %v284
        %427 = vmatmul.f32.gmra.mxu0 %v299
        %v428 = vpop.f32.mrf.mxu0
        %v429 = vadd.f32 %v294, %v428
        %430 = vmatmul.f32.gmra.mxu0 %v302
        %v431 = vpop.f32.mrf.mxu0
        %v432 = vadd.f32 %v294, %v431
        %433 = vmatmul.f32.gmra.mxu0 %v305
        %v434 = vpop.f32.mrf.mxu0
        %v435 = vadd.f32 %v294, %v434
        %436 = vmatmul.f32.gmra.mxu0 %v308
        %v437 = vpop.f32.mrf.mxu0
        %v438 = vadd.f32 %v294, %v437
        %439 = vmatmul.f32.gmra.mxu0 %v311
        %v440 = vpop.f32.mrf.mxu0
        %v441 = vadd.f32 %v294, %v440
        %442 = vmatmul.f32.gmra.mxu0 %v314
        %v443 = vpop.f32.mrf.mxu0
        %v444 = vadd.f32 %v294, %v443
        %445 = vmatmul.f32.gmra.mxu0 %v317
        %v446 = vpop.f32.mrf.mxu0
        %v447 = vadd.f32 %v294, %v446
        %448 = vmatmul.f32.gmra.mxu0 %v320
        %v449 = vpop.f32.mrf.mxu0
        %v450 = vadd.f32 %v294, %v449
        %451 = vmatmul.f32.gmra.mxu0 %v323
        %v452 = vpop.f32.mrf.mxu0
        %v453 = vadd.f32 %v294, %v452
        %454 = vmatmul.f32.gmra.mxu0 %v326
        %v455 = vpop.f32.mrf.mxu0
        %v456 = vadd.f32 %v294, %v455
        %457 = vmatmul.f32.gmra.mxu0 %v329
        %v458 = vpop.f32.mrf.mxu0
        %v459 = vadd.f32 %v294, %v458
        %460 = vmatmul.f32.gmra.mxu0 %v332
        %v461 = vpop.f32.mrf.mxu0
        %v462 = vadd.f32 %v294, %v461
        %463 = vmatmul.f32.gmra.mxu0 %v335
        %v464 = vpop.f32.mrf.mxu0
        %v465 = vadd.f32 %v294, %v464
        %466 = vmatmul.f32.gmra.mxu0 %v338
        %v467 = vpop.f32.mrf.mxu0
        %v468 = vadd.f32 %v294, %v467
        %469 = vmatmul.f32.gmra.mxu0 %v341
        %v470 = vpop.f32.mrf.mxu0
        %v471 = vadd.f32 %v294, %v470
        %472 = vmatmul.f32.gmra.mxu0 %v344
        %v473 = vpop.f32.mrf.mxu0
        %v474 = vadd.f32 %v294, %v473
        %475 = vdwg.mxu0
        %476 = vst [vmem:[%s246] sm:$0xff] %v364
        %477 = vst [vmem:[%s246 + $0x8] sm:$0xff] %v429
        %478 = vst [vmem:[%s246 + $0x10] sm:$0xff] %v367
        %479 = vst [vmem:[%s246 + $0x18] sm:$0xff] %v432
        %480 = vst [vmem:[%s246 + $0x20] sm:$0xff] %v370
        %481 = vst [vmem:[%s246 + $0x28] sm:$0xff] %v435
        %482 = vst [vmem:[%s246 + $0x30] sm:$0xff] %v373
        %483 = vst [vmem:[%s246 + $0x38] sm:$0xff] %v438
        %484 = vst [vmem:[%s246 + $0x40] sm:$0xff] %v376
        %485 = vst [vmem:[%s246 + $0x48] sm:$0xff] %v441
        %486 = vst [vmem:[%s246 + $0x50] sm:$0xff] %v379
        %487 = vst [vmem:[%s246 + $0x58] sm:$0xff] %v444
        %488 = vst [vmem:[%s246 + $0x60] sm:$0xff] %v382
        %489 = vst [vmem:[%s246 + $0x68] sm:$0xff] %v447
        %490 = vst [vmem:[%s246 + $0x70] sm:$0xff] %v385
        %491 = vst [vmem:[%s246 + $0x78] sm:$0xff] %v450
        %492 = vst [vmem:[%s246 + $0x80] sm:$0xff] %v388
        %493 = vst [vmem:[%s246 + $0x88] sm:$0xff] %v453
        %494 = vst [vmem:[%s246 + $0x90] sm:$0xff] %v391
        %495 = vst [vmem:[%s246 + $0x98] sm:$0xff] %v456
        %496 = vst [vmem:[%s246 + $0xa0] sm:$0xff] %v394
        %497 = vst [vmem:[%s246 + $0xa8] sm:$0xff] %v459
        %498 = vst [vmem:[%s246 + $0xb0] sm:$0xff] %v397
        %499 = vst [vmem:[%s246 + $0xb8] sm:$0xff] %v462
        %500 = vst [vmem:[%s246 + $0xc0] sm:$0xff] %v400
        %501 = vst [vmem:[%s246 + $0xc8] sm:$0xff] %v465
        %502 = vst [vmem:[%s246 + $0xd0] sm:$0xff] %v403
        %503 = vst [vmem:[%s246 + $0xd8] sm:$0xff] %v468
        %504 = vst [vmem:[%s246 + $0xe0] sm:$0xff] %v406
        %505 = vst [vmem:[%s246 + $0xe8] sm:$0xff] %v471
        %506 = vst [vmem:[%s246 + $0xf0] sm:$0xff] %v409
        %507 = vst [vmem:[%s246 + $0xf8] sm:$0xff] %v474
        %v508 = vmul.f32 %v364, 0.2
        %v509 = vmul.f32 %v429, 0.2
        %v510 = vmul.f32 %v367, 0.2
        %v511 = vmul.f32 %v432, 0.2
        %v512 = vmul.f32 %v370, 0.2
        %v513 = vmul.f32 %v435, 0.2
        %v514 = vmul.f32 %v373, 0.2
        %v515 = vmul.f32 %v438, 0.2
        %v516 = vmul.f32 %v376, 0.2
        %v517 = vmul.f32 %v441, 0.2
        %v518 = vmul.f32 %v379, 0.2
        %v519 = vmul.f32 %v444, 0.2
        %v520 = vmul.f32 %v382, 0.2
        %v521 = vmul.f32 %v447, 0.2
        %v522 = vmul.f32 %v385, 0.2
        %v523 = vmul.f32 %v450, 0.2
        %v524 = vmul.f32 %v388, 0.2
        %v525 = vmul.f32 %v453, 0.2
        %v526 = vmul.f32 %v391, 0.2
        %v527 = vmul.f32 %v456, 0.2
        %v528 = vmul.f32 %v394, 0.2
        %v529 = vmul.f32 %v459, 0.2
        %v530 = vmul.f32 %v397, 0.2
        %v531 = vmul.f32 %v462, 0.2
        %v532 = vmul.f32 %v400, 0.2
        %v533 = vmul.f32 %v465, 0.2
        %v534 = vmul.f32 %v403, 0.2
        %v535 = vmul.f32 %v468, 0.2
        %v536 = vmul.f32 %v406, 0.2
        %v537 = vmul.f32 %v471, 0.2
        %v538 = vmul.f32 %v409, 0.2
        %v539 = vmul.f32 %v474, 0.2
        %v540 = vmax.f32 %v364, %v508
        %v541 = vmax.f32 %v429, %v509
        %v542 = vmax.f32 %v367, %v510
        %v543 = vmax.f32 %v432, %v511
        %v544 = vmax.f32 %v370, %v512
        %v545 = vmax.f32 %v435, %v513
        %v546 = vmax.f32 %v373, %v514
        %v547 = vmax.f32 %v438, %v515
        %v548 = vmax.f32 %v376, %v516
        %v549 = vmax.f32 %v441, %v517
        %v550 = vmax.f32 %v379, %v518
        %v551 = vmax.f32 %v444, %v519
        %v552 = vmax.f32 %v382, %v520
        %v553 = vmax.f32 %v447, %v521
        %v554 = vmax.f32 %v385, %v522
        %v555 = vmax.f32 %v450, %v523
        %v556 = vmax.f32 %v388, %v524
        %v557 = vmax.f32 %v453, %v525
        %v558 = vmax.f32 %v391, %v526
        %v559 = vmax.f32 %v456, %v527
        %v560 = vmax.f32 %v394, %v528
        %v561 = vmax.f32 %v459, %v529
        %v562 = vmax.f32 %v397, %v530
        %v563 = vmax.f32 %v462, %v531
        %v564 = vmax.f32 %v400, %v532
        %v565 = vmax.f32 %v465, %v533
        %v566 = vmax.f32 %v403, %v534
        %v567 = vmax.f32 %v468, %v535
        %v568 = vmax.f32 %v406, %v536
        %v569 = vmax.f32 %v471, %v537
        %v570 = vmax.f32 %v409, %v538
        %v571 = vmax.f32 %v474, %v539
        %v572 = vld [vmem:[%s3] sm:$0xff]
        %v573 = vld [vmem:[%s3 + $0x8] sm:$0xff]
        %v574 = vld [vmem:[%s3 + $0x10] sm:$0xff]
        %v575 = vld [vmem:[%s3 + $0x18] sm:$0xff]
        %v576 = vld [vmem:[%s3 + $0x20] sm:$0xff]
        %v577 = vld [vmem:[%s3 + $0x28] sm:$0xff]
        %v578 = vld [vmem:[%s3 + $0x30] sm:$0xff]
        %v579 = vld [vmem:[%s3 + $0x38] sm:$0xff]
        %v580 = vld [vmem:[%s3 + $0x40] sm:$0xff]
        %v581 = vld [vmem:[%s3 + $0x48] sm:$0xff]
        %v582 = vld [vmem:[%s3 + $0x50] sm:$0xff]
        %v583 = vld [vmem:[%s3 + $0x58] sm:$0xff]
        %v584 = vld [vmem:[%s3 + $0x60] sm:$0xff]
        %v585 = vld [vmem:[%s3 + $0x68] sm:$0xff]
        %v586 = vld [vmem:[%s3 + $0x70] sm:$0xff]
        %v587 = vld [vmem:[%s3 + $0x78] sm:$0xff]
        %v588 = vld [vmem:[%s3 + $0x80] sm:$0xff]
        %v589 = vld [vmem:[%s3 + $0x88] sm:$0xff]
        %v590 = vld [vmem:[%s3 + $0x90] sm:$0xff]
        %v591 = vld [vmem:[%s3 + $0x98] sm:$0xff]
        %v592 = vld [vmem:[%s3 + $0xa0] sm:$0xff]
        %v593 = vld [vmem:[%s3 + $0xa8] sm:$0xff]
        %v594 = vld [vmem:[%s3 + $0xb0] sm:$0xff]
        %v595 = vld [vmem:[%s3 + $0xb8] sm:$0xff]
        %v596 = vld [vmem:[%s3 + $0xc0] sm:$0xff]
        %v597 = vld [vmem:[%s3 + $0xc8] sm:$0xff]
        %v598 = vld [vmem:[%s3 + $0xd0] sm:$0xff]
        %v599 = vld [vmem:[%s3 + $0xd8] sm:$0xff]
        %v600 = vld [vmem:[%s3 + $0xe0] sm:$0xff]
        %v601 = vld [vmem:[%s3 + $0xe8] sm:$0xff]
        %v602 = vld [vmem:[%s3 + $0xf0] sm:$0xff]
        %v603 = vld [vmem:[%s3 + $0xf8] sm:$0xff]
        %v604 = vld [vmem:[%s4] sm:$0x1]
        %v606 = vperm.slane %v604, 0
        %608 = vmatpush.msra.mxu0 %v587
        %609 = vmatpush.msra.mxu0 %v586
        %610 = vmatpush.msra.mxu0 %v585
        %611 = vmatpush.msra.mxu0 %v584
        %612 = vmatpush.msra.mxu0 %v583
        %613 = vmatpush.msra.mxu0 %v582
        %614 = vmatpush.msra.mxu0 %v581
        %615 = vmatpush.msra.mxu0 %v580
        %616 = vmatpush.msra.mxu0 %v579
        %617 = vmatpush.msra.mxu0 %v578
        %618 = vmatpush.msra.mxu0 %v577
        %619 = vmatpush.msra.mxu0 %v576
        %620 = vmatpush.msra.mxu0 %v575
        %621 = vmatpush.msra.mxu0 %v574
        %622 = vmatpush.msra.mxu0 %v573
        %623 = vmatpush.msra.mxu0 %v572
        %624 = vmatmul.f32.gmra.mxu0 %v540
        %v625 = vpop.f32.mrf.mxu0
        %v626 = vadd.f32 %v606, %v625
        %627 = vmatmul.f32.gmra.mxu0 %v542
        %v628 = vpop.f32.mrf.mxu0
        %v629 = vadd.f32 %v606, %v628
        %630 = vmatmul.f32.gmra.mxu0 %v544
        %v631 = vpop.f32.mrf.mxu0
        %v632 = vadd.f32 %v606, %v631
        %633 = vmatmul.f32.gmra.mxu0 %v546
        %v634 = vpop.f32.mrf.mxu0
        %v635 = vadd.f32 %v606, %v634
        %636 = vmatmul.f32.gmra.mxu0 %v548
        %v637 = vpop.f32.mrf.mxu0
        %v638 = vadd.f32 %v606, %v637
        %639 = vmatmul.f32.gmra.mxu0 %v550
        %v640 = vpop.f32.mrf.mxu0
        %v641 = vadd.f32 %v606, %v640
        %642 = vmatmul.f32.gmra.mxu0 %v552
        %v643 = vpop.f32.mrf.mxu0
        %v644 = vadd.f32 %v606, %v643
        %645 = vmatmul.f32.gmra.mxu0 %v554
        %v646 = vpop.f32.mrf.mxu0
        %v647 = vadd.f32 %v606, %v646
        %648 = vmatmul.f32.gmra.mxu0 %v556
        %v649 = vpop.f32.mrf.mxu0
        %v650 = vadd.f32 %v606, %v649
        %651 = vmatmul.f32.gmra.mxu0 %v558
        %v652 = vpop.f32.mrf.mxu0
        %v653 = vadd.f32 %v606, %v652
        %654 = vmatmul.f32.gmra.mxu0 %v560
        %v655 = vpop.f32.mrf.mxu0
        %v656 = vadd.f32 %v606, %v655
        %657 = vmatmul.f32.gmra.mxu0 %v562
        %v658 = vpop.f32.mrf.mxu0
        %v659 = vadd.f32 %v606, %v658
        %660 = vmatmul.f32.gmra.mxu0 %v564
        %v661 = vpop.f32.mrf.mxu0
        %v662 = vadd.f32 %v606, %v661
        %663 = vmatmul.f32.gmra.mxu0 %v566
        %v664 = vpop.f32.mrf.mxu0
        %v665 = vadd.f32 %v606, %v664
        %666 = vmatmul.f32.gmra.mxu0 %v568
        %v667 = vpop.f32.mrf.mxu0
        %v668 = vadd.f32 %v606, %v667
        %669 = vmatmul.f32.gmra.mxu0 %v570
        %v670 = vpop.f32.mrf.mxu0
        %v671 = vadd.f32 %v606, %v670
        %672 = vdwg.mxu0
        %673 = vmatpush.msra.mxu0 %v603
        %674 = vmatpush.msra.mxu0 %v602
        %675 = vmatpush.msra.mxu0 %v601
        %676 = vmatpush.msra.mxu0 %v600
        %677 = vmatpush.msra.mxu0 %v599
        %678 = vmatpush.msra.mxu0 %v598
        %679 = vmatpush.msra.mxu0 %v597
        %680 = vmatpush.msra.mxu0 %v596
        %681 = vmatpush.msra.mxu0 %v595
        %682 = vmatpush.msra.mxu0 %v594
        %683 = vmatpush.msra.mxu0 %v593
        %684 = vmatpush.msra.mxu0 %v592
        %685 = vmatpush.msra.mxu0 %v591
        %686 = vmatpush.msra.mxu0 %v590
        %687 = vmatpush.msra.mxu0 %v589
        %688 = vmatpush.msra.mxu0 %v588
        %689 = vmatmul.f32.gmra.mxu0 %v541
        %v690 = vpop.f32.mrf.mxu0
        %v691 = vadd.f32 %v626, %v690
        %692 = vmatmul.f32.gmra.mxu0 %v543
        %v693 = vpop.f32.mrf.mxu0
        %v694 = vadd.f32 %v629, %v693
        %695 = vmatmul.f32.gmra.mxu0 %v545
        %v696 = vpop.f32.mrf.mxu0
        %v697 = vadd.f32 %v632, %v696
        %698 = vmatmul.f32.gmra.mxu0 %v547
        %v699 = vpop.f32.mrf.mxu0
        %v700 = vadd.f32 %v635, %v699
        %701 = vmatmul.f32.gmra.mxu0 %v549
        %v702 = vpop.f32.mrf.mxu0
        %v703 = vadd.f32 %v638, %v702
        %704 = vmatmul.f32.gmra.mxu0 %v551
        %v705 = vpop.f32.mrf.mxu0
        %v706 = vadd.f32 %v641, %v705
        %707 = vmatmul.f32.gmra.mxu0 %v553
        %v708 = vpop.f32.mrf.mxu0
        %v709 = vadd.f32 %v644, %v708
        %710 = vmatmul.f32.gmra.mxu0 %v555
        %v711 = vpop.f32.mrf.mxu0
        %v712 = vadd.f32 %v647, %v711
        %713 = vmatmul.f32.gmra.mxu0 %v557
        %v714 = vpop.f32.mrf.mxu0
        %v715 = vadd.f32 %v650, %v714
        %716 = vmatmul.f32.gmra.mxu0 %v559
        %v717 = vpop.f32.mrf.mxu0
        %v718 = vadd.f32 %v653, %v717
        %719 = vmatmul.f32.gmra.mxu0 %v561
        %v720 = vpop.f32.mrf.mxu0
        %v721 = vadd.f32 %v656, %v720
        %722 = vmatmul.f32.gmra.mxu0 %v563
        %v723 = vpop.f32.mrf.mxu0
        %v724 = vadd.f32 %v659, %v723
        %725 = vmatmul.f32.gmra.mxu0 %v565
        %v726 = vpop.f32.mrf.mxu0
        %v727 = vadd.f32 %v662, %v726
        %728 = vmatmul.f32.gmra.mxu0 %v567
        %v729 = vpop.f32.mrf.mxu0
        %v730 = vadd.f32 %v665, %v729
        %731 = vmatmul.f32.gmra.mxu0 %v569
        %v732 = vpop.f32.mrf.mxu0
        %v733 = vadd.f32 %v668, %v732
        %734 = vmatmul.f32.gmra.mxu0 %v571
        %v735 = vpop.f32.mrf.mxu0
        %v736 = vadd.f32 %v671, %v735
        %737 = vdwg.mxu0
        %vm738 = vcmask 130048
        %739 = vst.msk [vmem:[%s265] sm:$0xff] %vm738, %v691
        %740 = vst.msk [vmem:[%s265 + $0x8] sm:$0xff] %vm738, %v694
        %741 = vst.msk [vmem:[%s265 + $0x10] sm:$0xff] %vm738, %v697
        %742 = vst.msk [vmem:[%s265 + $0x18] sm:$0xff] %vm738, %v700
        %743 = vst.msk [vmem:[%s265 + $0x20] sm:$0xff] %vm738, %v703
        %744 = vst.msk [vmem:[%s265 + $0x28] sm:$0xff] %vm738, %v706
        %745 = vst.msk [vmem:[%s265 + $0x30] sm:$0xff] %vm738, %v709
        %746 = vst.msk [vmem:[%s265 + $0x38] sm:$0xff] %vm738, %v712
        %747 = vst.msk [vmem:[%s265 + $0x40] sm:$0xff] %vm738, %v715
        %748 = vst.msk [vmem:[%s265 + $0x48] sm:$0xff] %vm738, %v718
        %749 = vst.msk [vmem:[%s265 + $0x50] sm:$0xff] %vm738, %v721
        %750 = vst.msk [vmem:[%s265 + $0x58] sm:$0xff] %vm738, %v724
        %751 = vst.msk [vmem:[%s265 + $0x60] sm:$0xff] %vm738, %v727
        %752 = vst.msk [vmem:[%s265 + $0x68] sm:$0xff] %vm738, %v730
        %753 = vst.msk [vmem:[%s265 + $0x70] sm:$0xff] %vm738, %v733
        %754 = vst.msk [vmem:[%s265 + $0x78] sm:$0xff] %vm738, %v736
        %s755 = sand.u32 %s139, 1
        %s756 = scalar_lea.sflag [#allocation3], %s755
        %s757 = sand.u32 %s139, 1
        %s758 = smul.addr %s757, 256
        %s759 = scalar_lea.vmem [#allocation2], %s758
        %s760 = smul.u32 16, %s21
        %p761 = scmp.lt.s32.totalorder %s760, 31
        %s762 = scalar_select %p761, %s760, 31
        %s763 = smul.addr %s762, 8
        %s764 = scalar_lea.vmem %s6, %s763
        // Predicated region
        $region41: #{classifier_forward.1} parent=39 // pred_check
          %p765 = pneg %p149
        $region42: #{classifier_forward.1} parent=39 // pred_check_branch
          %767 = sbr.rel (%p765) target = $region44
        $region43: #{classifier_forward.1} parent=39 // pred_region
          %s768 = smul.u32 16, %s21
          %770 = vsyncadd %s756, 0
          %s771 = smul.addr %s768, 2
          %s772 = smul.addr %s771, 8
          %s773 = scalar_lea.hbm %s5, %s772
          %s774 = sshll.u32 %s759, 4
          %s775 = int_to_ptr.vmem [resolvable:$true] %s774
          %s776 = sshll.u32 %s773, 4
          %s777 = int_to_ptr.hbm [resolvable:$true] %s776
          %782 = dma.vmem_to_hbm [thread:$0]  %s775, 4096, %s777, %s756, 256, 256, 16
        $region44: #{classifier_forward.1} parent=39 // pred_fallthru
          _
        // Predicated region
        $region45: #{classifier_forward.1} parent=39 // pred_check
          %p783 = pneg %p175
        $region46: #{classifier_forward.1} parent=39 // pred_check_branch
          %785 = sbr.rel (%p783) target = $region48
        $region47: #{classifier_forward.1} parent=39 // pred_region
          %s786 = smul.u32 16, %s21
        $region48: #{classifier_forward.1} parent=39 // pred_fallthru
          _
      $region40: #{classifier_forward.1} parent=5 // pred_fallthru
        _
      %p787 = scmp.le.s32.totalorder 2, %s16
      // Predicated region
      $region49: #{classifier_forward.1} parent=5 // pred_check
        %p788 = pneg %p787
      $region50: #{classifier_forward.1} parent=5 // pred_check_branch
        %790 = sbr.rel (%p788) target = $region52
      $region51: #{classifier_forward.1} parent=5 // pred_region
        %s791 = ssub.s32 %s16, 2
        // Predicated region
        $region53: #{classifier_forward.1} parent=51 // pred_check
          %p792 = pneg %p155
        $region54: #{classifier_forward.1} parent=51 // pred_check_branch
          %794 = sbr.rel (%p792) target = $region56
        $region55: #{classifier_forward.1} parent=51 // pred_region
          %s795 = sand.u32 %s140, 1
          %s796 = scalar_lea.sflag [#allocation3], %s795
          %s797 = sand.u32 %s140, 1
          %s798 = smul.addr %s797, 256
          %s799 = scalar_lea.vmem [#allocation2], %s798
          %801 = dma.done %s796, 4096
        $region56: #{classifier_forward.1} parent=51 // pred_fallthru
          _
        // Predicated region
        $region57: #{classifier_forward.1} parent=51 // pred_check
          %p802 = pneg %p181
        $region58: #{classifier_forward.1} parent=51 // pred_check_branch
          %804 = sbr.rel (%p802) target = $region60
        $region59: #{classifier_forward.1} parent=51 // pred_region
          %s805 = smul.u32 16, %s22
          %p806 = scmp.lt.s32.totalorder %s805, 31
          %s807 = scalar_select %p806, %s805, 31
          %s808 = smul.addr %s807, 8
          %s809 = scalar_lea.vmem %s6, %s808
        $region60: #{classifier_forward.1} parent=51 // pred_fallthru
          _
      $region52: #{classifier_forward.1} parent=5 // pred_fallthru
        _
    $region6: #{classifier_forward.1} parent=1 // loop_footer
      %s20 = sadd.s32 1, %s16
    $region7: #{classifier_forward.1} parent=1 // loop_footer_branch
      %15 = sbr.rel target = $region3
    $region8: #{classifier_forward.1} parent=1 // loop_exit
      _
    %810 = vsyncpa [#allocation3], 1
    %s811 = scalar_lea.sflag [#allocation3], 1
    %812 = vsyncpa %s811, 1

</llo_original>
